<compile_context>
chip_gen: v5e
topology: v5e:2x2
jax: 0.10.0
libtpu: 0.0.40
codegen_flags: <defaults>
</compile_context>

<pallas_src>
import jax
import jax.numpy as jnp
from jax import lax
from jax.experimental import pallas as pl
from jax.experimental.pallas import tpu as pltpu

# Per-buffer tile budget.  2 arrays x 2 pipeline buffers x 4 MiB = 16 MiB
# resident: comfortably inside v7x's 64 MiB physical VMEM (32 MiB default
# scoped limit) while staying large enough to sit near the HBM copy roofline.
_BLOCK_BYTES_TARGET = 4 * 1024 * 1024
_VMEM_LIMIT_FLOOR = 32 * 1024 * 1024
_VMEM_LIMIT_CAP = 64 * 1024 * 1024      # v7x physical VMEM per TensorCore


def _best_divisor(n, cap, align=1):
    """Largest d with d | n, d % align == 0 and d <= cap, or None."""
    cap = min(cap, n)
    d = (cap // align) * align
    while d >= align:
        if n % d == 0:
            return d
        d -= align
    return None


def _choose_blocks(shape, itemsize, minor_swap):
    """Per-dim block shape under the VMEM budget.

    Leading (major) dims are shrunk first so the trailing dims stay
    lane-dense (large, unmasked stores); the last two dims are only tiled
    when a full "row block" would not fit, and then only in (8,128)-legal
    multiples (128 on any dim that ends up in the lane position of either the
    input or the output block), otherwise they are kept at full extent.
    """
    nd = len(shape)
    budget = max(_BLOCK_BYTES_TARGET // itemsize, 1)
    blocks = list(shape)

    sub_align = {1: 32, 2: 16}.get(itemsize, 8)
    align = [1] * nd
    if minor_swap:
        # Each of the last two dims is the lane dim of either input or output.
        align[nd - 2] = 128
        align[nd - 1] = 128
    else:
        align[nd - 2] = sub_align
        align[nd - 1] = 128

    def total():
        t = 1
        for v in blocks:
            t *= v
        return t

    for d in list(range(nd - 2)) + [nd - 2, nd - 1]:
        if total() <= budget:
            break
        rest = total() // blocks[d]
        cap = max(budget // rest, 1)
        cand = _best_divisor(shape[d], cap, align[d])
        if cand is None and align[d] > 1 and shape[d] % align[d] == 0:
            cand = align[d]             # smallest legal tile on this dim
        if cand is not None and cand < blocks[d]:
            blocks[d] = cand
    return blocks


def _call(kernel, x, out_shape, in_block, out_block, in_map, out_map, grid,
          block_bytes):
    """Shared pallas_call wrapper (vmem limit + parallel grid semantics)."""
    vmem_limit = int(min(_VMEM_LIMIT_CAP,
                         max(_VMEM_LIMIT_FLOOR, 4 * block_bytes + (4 << 20))))
    compiler_params = pltpu.CompilerParams(
        dimension_semantics=("parallel",) * len(grid) if grid else None,
        vmem_limit_bytes=vmem_limit,
    )
    kwargs = dict(grid=grid) if grid else {}
    return pl.pallas_call(
        kernel,
        out_shape=jax.ShapeDtypeStruct(tuple(out_shape), x.dtype),
        in_specs=[pl.BlockSpec(tuple(in_block), in_map)],
        out_specs=pl.BlockSpec(tuple(out_block), out_map),
        compiler_params=compiler_params,
        **kwargs,
    )(x)


def _whole_array_swap(x, a, b, out_shape):
    """Small-tensor fast path: one grid step, whole-array in-VMEM swapaxes."""
    nd = x.ndim

    def kernel(x_ref, o_ref):
        o_ref[...] = jnp.swapaxes(x_ref[...], a, b)

    zero_map = lambda: (0,) * nd
    return _call(kernel, x, out_shape, x.shape, out_shape, zero_map, zero_map,
                 (), x.size * x.dtype.itemsize)


def _minor_swap_tiled(x, out_shape):
    """Swap of the two minor (last-two) axes: batched in-VMEM transpose."""
    lead = x.shape[:-2]
    H, W = x.shape[-2], x.shape[-1]
    L = 1
    for s in lead:
        L *= s
    x3 = x.reshape((L, H, W))
    itemsize = x.dtype.itemsize

    blocks = _choose_blocks((L, H, W), itemsize, minor_swap=True)
    LB, TH, TW = blocks
    shape3 = (L, H, W)
    grid_dims = tuple(d for d in range(3) if shape3[d] != blocks[d])
    grid = tuple(shape3[d] // blocks[d] for d in grid_dims)
    block_bytes = LB * TH * TW * itemsize

    def make_index_map(swap_minor):
        def index_map(*gidx):
            idx = [0, 0, 0]
            for k, d in enumerate(grid_dims):
                idx[d] = gidx[k]
            if swap_minor:
                idx[1], idx[2] = idx[2], idx[1]
            return tuple(idx)
        return index_map

    in_map, out_map = make_index_map(False), make_index_map(True)
    in_block, out_block = (LB, TH, TW), (LB, TW, TH)

    def batched_kernel(x_ref, o_ref):
        # One block-wide batched XLU transpose + one lane-dense store.
        o_ref[...] = jnp.swapaxes(x_ref[...], 1, 2)

    def looped_kernel(x_ref, o_ref):
        # Fallback if this build rejects batched (0,2,1) transposes:
        # one 2-D XLU transpose per leading slice (fori_loop bounds the
        # live ranges instead of a fully-unrolled Python loop).
        def body(l, carry):
            o_ref[l] = x_ref[l].T
            return carry
        lax.fori_loop(0, x_ref.shape[0], body, 0)

    try:
        y3 = _call(batched_kernel, x3, (L, W, H), in_block, out_block,
                   in_map, out_map, grid, block_bytes)
    except Exception:
        y3 = _call(looped_kernel, x3, (L, W, H), in_block, out_block,
                   in_map, out_map, grid, block_bytes)
    return y3.reshape(out_shape)


def _major_swap_tiled(x, a, b, out_shape):
    """Swap of two leading (major) axes, both strictly before the last two.

    The permutation lives entirely in the BlockSpec index_maps (DMA
    addressing); the kernel body is a plain lane-dense copy.  The cheaper
    swapped axis (plus, for non-adjacent swaps, the dims between the two) is
    walked element-wise by the grid with its block dim squeezed; the other
    swapped axis and the trailing dims stay as large as the VMEM budget
    allows, so each grid step moves one big contiguous slab.
    """
    nd = x.ndim
    shape = x.shape
    itemsize = x.dtype.itemsize

    mid = tuple(range(a + 1, b))
    candidates = ((a, b), (a,) + mid, (b,) + mid)

    def _extent(dims):
        p = 1
        for d in dims:
            p *= shape[d]
        return p

    squeeze = set(min(candidates, key=_extent))

    eff_shape = tuple(1 if d in squeeze else shape[d] for d in range(nd))
    blocks = _choose_blocks(eff_shape, itemsize, minor_swap=False)

    in_block = [None if d in squeeze else blocks[d] for d in range(nd)]
    out_block = list(in_block)
    out_block[a], out_block[b] = out_block[b], out_block[a]

    grid_dims = tuple(d for d in range(nd)
                      if d in squeeze or shape[d] != blocks[d])
    grid = tuple(shape[d] if d in squeeze else shape[d] // blocks[d]
                 for d in grid_dims)

    def make_index_map(swap_ab):
        def index_map(*gidx):
            idx = [0] * nd
            for k, d in enumerate(grid_dims):
                idx[d] = gidx[k]
            if swap_ab:
                idx[a], idx[b] = idx[b], idx[a]
            return tuple(idx)
        return index_map

    def copy_kernel(x_ref, o_ref):
        o_ref[...] = x_ref[...]

    block_bytes = itemsize
    for d in range(nd):
        if d not in squeeze:
            block_bytes *= blocks[d]

    return _call(copy_kernel, x, out_shape, in_block, out_block,
                 make_index_map(False), make_index_map(True), grid,
                 block_bytes)


def pallas_transpose(x, dim_1, dim_2):
    """Pallas equivalent of `x.transpose(dim_1, dim_2)` (PyTorch semantics)."""
    nd = x.ndim
    if nd == 0:
        return x
    a = dim_1 % nd
    b = dim_2 % nd
    if a > b:
        a, b = b, a
    if a == b:
        # Mathematical no-op -> skip the kernel (no HBM round trip at all).
        return x

    out_shape = list(x.shape)
    out_shape[a], out_shape[b] = out_shape[b], out_shape[a]
    out_shape = tuple(out_shape)

    # Small-tensor fast path: single grid step, one DMA in / one DMA out.
    if x.size * x.dtype.itemsize <= _BLOCK_BYTES_TARGET:
        try:
            return _whole_array_swap(x, a, b, out_shape)
        except Exception:
            pass  # permutation not supported in-kernel; use structured paths

    if a == nd - 2 and b == nd - 1:
        return _minor_swap_tiled(x, out_shape)
    if b < nd - 2:
        return _major_swap_tiled(x, a, b, out_shape)

    # TODO(synk): tiled swap of a leading axis with one of the two minor axes
    # needs a major<->sublane/lane relayout; only the small-tensor
    # whole-array fast path above covers it (when the build supports it).
    raise NotImplementedError(
        "Transpose of a leading axis with a minor (last-two) axis is only "
        "supported through the small-tensor fast path.")


if __name__ == "__main__":
    key = jax.random.PRNGKey(0)
    k1, k2 = jax.random.split(key)

    # Transpose(1, 2) on (batch, seq, hidden) = (2, 16, 32): the (B,T,C) <->
    # (B,C,T) flip this module is typically used for (minor-axes swap).
    x = jax.random.normal(k1, (2, 16, 32), dtype=jnp.float32)
    y = pallas_transpose(x, 1, 2)
    jax.block_until_ready(y)
    assert y.shape == (2, 32, 16)
    assert jnp.array_equal(y, jnp.swapaxes(x, 1, 2))

    # Transpose(0, 1) on (2, 4, 16, 16): major-axes swap.
    x4 = jax.random.normal(k2, (2, 4, 16, 16), dtype=jnp.float32)
    y4 = pallas_transpose(x4, 0, 1)
    jax.block_until_ready(y4)
    assert y4.shape == (4, 2, 16, 16)
    assert jnp.array_equal(y4, jnp.swapaxes(x4, 0, 1))

    # Transpose(d, d): identity, no kernel launched at all.
    y_id = pallas_transpose(x4, 1, 1)
    assert y_id is x4

    print("KERNEL_OK")
</pallas_src>

<mosaic_0001>
module attributes {stable_mosaic.version = 11 : i64} {
  func.func @kernel(%arg0: memref<2x16x32xf32, #tpu.memory_space<vmem>>, %arg1: memref<2x32x16xf32, #tpu.memory_space<vmem>>) attributes {dimension_semantics = [], scalar_prefetch = 0 : i64, scratch_operands = 0 : i64, tpu.core_type = #tpu.core_type<tc>} {
    %c0 = arith.constant 0 : index
    %c0_0 = arith.constant 0 : index
    %c0_1 = arith.constant 0 : index
    %0 = vector.load %arg0[%c0, %c0_0, %c0_1] : memref<2x16x32xf32, #tpu.memory_space<vmem>>, vector<2x16x32xf32>
    %1 = tpu.transpose %0, [0, 2, 1] : vector<2x16x32xf32> -> vector<2x32x16xf32>
    %c0_2 = arith.constant 0 : index
    %c0_3 = arith.constant 0 : index
    %c0_4 = arith.constant 0 : index
    %2 = vector.load %arg1[%c0_2, %c0_3, %c0_4] : memref<2x32x16xf32, #tpu.memory_space<vmem>>, vector<2x32x16xf32>
    tpu.vector_store %arg1[%c0_2, %c0_3, %c0_4], %1 {strides = array<i32>} : memref<2x32x16xf32, #tpu.memory_space<vmem>>, vector<2x32x16xf32>,
    return
  }
}

module attributes {stable_mosaic.version = 11 : i64} {
  func.func @batched_kernel(%arg0: memref<2x16x32xf32, #tpu.memory_space<vmem>>, %arg1: memref<2x32x16xf32, #tpu.memory_space<vmem>>) attributes {dimension_semantics = [], scalar_prefetch = 0 : i64, scratch_operands = 0 : i64, tpu.core_type = #tpu.core_type<tc>} {
    %c0 = arith.constant 0 : index
    %c0_0 = arith.constant 0 : index
    %c0_1 = arith.constant 0 : index
    %0 = vector.load %arg0[%c0, %c0_0, %c0_1] : memref<2x16x32xf32, #tpu.memory_space<vmem>>, vector<2x16x32xf32>
    %1 = tpu.transpose %0, [0, 2, 1] : vector<2x16x32xf32> -> vector<2x32x16xf32>
    %c0_2 = arith.constant 0 : index
    %c0_3 = arith.constant 0 : index
    %c0_4 = arith.constant 0 : index
    %2 = vector.load %arg1[%c0_2, %c0_3, %c0_4] : memref<2x32x16xf32, #tpu.memory_space<vmem>>, vector<2x32x16xf32>
    tpu.vector_store %arg1[%c0_2, %c0_3, %c0_4], %1 {strides = array<i32>} : memref<2x32x16xf32, #tpu.memory_space<vmem>>, vector<2x32x16xf32>,
    return
  }
}

module attributes {stable_mosaic.version = 11 : i64} {
  func.func @looped_kernel(%arg0: memref<2x16x32xf32, #tpu.memory_space<vmem>>, %arg1: memref<2x32x16xf32, #tpu.memory_space<vmem>>) attributes {dimension_semantics = [], scalar_prefetch = 0 : i64, scratch_operands = 0 : i64, tpu.core_type = #tpu.core_type<tc>} {
    %c0_i32 = arith.constant 0 : i32
    %c2_i32 = arith.constant 2 : i32
    %0 = arith.addi %c0_i32, %c2_i32 : i32
    %c1_i32 = arith.constant 1 : i32
    scf.for %arg2 = %c0_i32 to %0 step %c1_i32  : i32 {
      %1 = arith.index_cast %arg2 : i32 to index
      %c0 = arith.constant 0 : index
      %c0_1 = arith.constant 0 : index
      %2 = vector.load %arg0[%1, %c0, %c0_1] : memref<2x16x32xf32, #tpu.memory_space<vmem>>, vector<1x16x32xf32>
      %3 = vector.shape_cast %2 : vector<1x16x32xf32> to vector<16x32xf32>
      %4 = tpu.transpose %3, [1, 0] : vector<16x32xf32> -> vector<32x16xf32>
      %5 = arith.index_cast %arg2 : i32 to index
      %c0_2 = arith.constant 0 : index
      %c0_3 = arith.constant 0 : index
      %6 = vector.load %arg1[%5, %c0_2, %c0_3] : memref<2x32x16xf32, #tpu.memory_space<vmem>>, vector<1x32x16xf32>
      %7 = vector.shape_cast %6 : vector<1x32x16xf32> to vector<32x16xf32>
      %8 = vector.shape_cast %4 : vector<32x16xf32> to vector<1x32x16xf32>
      tpu.vector_store %arg1[%5, %c0_2, %c0_3], %8 {strides = array<i32>} : memref<2x32x16xf32, #tpu.memory_space<vmem>>, vector<1x32x16xf32>,
    }
    %c2_i32_0 = arith.constant 2 : i32
    return
  }
}

</mosaic_0001>

<llo_original>
// kernel: tpu_custom_call.1
$region0: #{tpu_custom_call.1}
  #allocation0 [shape = 'u32[]', space=smem, size = 0x4, offset = 0x4, fixed_abs, tag = 'smem constant byte address 0x4 - core index']
  #allocation1 [shape = 'u32[72,128]{1,0:T(1,128)}', space=vmem, size = 0x9000, scoped, tag = 'internal scratch']
  %s0 = inlined_call_operand.hbm [shape: f32[2,16,32], index: 0, kind: input, shape index: {}]
  %s1 = inlined_call_operand.vmem [shape: f32[2,32,16], index: 1, kind: output, shape index: {}]
  %s2 = sld [smem:[#allocation0]]
  $region18: #{tpu_custom_call.1} parent=0
    _
  %s4 = ssub.s32 1, %s2
  %s5 = scalar_select 0, %s4, %s2
  $region1: #{tpu_custom_call.1} parent=0
    #allocation2 [shape = 'u8[16384]{0}', space=vmem, size = 0x4000, scoped, tag = 'input window, operand 0, single buffered']
    #allocation3 [shape = 's32[1]{0}', space=sflag, size = 0x4, scoped, tag = 'scoped memory for tpu_custom_call.1']
    %6 = vsyncpa [#allocation3], 0
    // Predicated region
    $region2: #{tpu_custom_call.1} parent=1 // pred_check
      _
    $region3: #{tpu_custom_call.1} parent=1 // pred_check_branch
      %8 = sbr.rel (0) target = $region5
    $region4: #{tpu_custom_call.1} parent=1 // pred_region
      %10 = vsyncadd [#allocation3], 0
      %s11 = sshll.u32 %s0, 4
      %s12 = int_to_ptr.hbm [resolvable:$true] %s11
      %s13 = sshll.u32 [#allocation2], 4
      %s14 = int_to_ptr.vmem [resolvable:$true] %s13
      %19 = dma.hbm_to_vmem [thread:$0]  %s12, 512, %s14, [#allocation3], 128, 128, 8
    $region5: #{tpu_custom_call.1} parent=1 // pred_fallthru
      _
    // Predicated region
    $region6: #{tpu_custom_call.1} parent=1 // pred_check
      _
    $region7: #{tpu_custom_call.1} parent=1 // pred_check_branch
      %21 = sbr.rel (0) target = $region9
    $region8: #{tpu_custom_call.1} parent=1 // pred_region
      %23 = dma.done [#allocation3], 512
    $region9: #{tpu_custom_call.1} parent=1 // pred_fallthru
      _
    %v24 = vld [vmem:[#allocation2] sm:$0xff]
    %v25 = vld [vmem:[#allocation2 + $0x8] sm:$0xff]
    %v26 = vld [vmem:[#allocation2 + $0x10] sm:$0xff]
    %v27 = vld [vmem:[#allocation2 + $0x18] sm:$0xff]
    %28 = vxpose.xlu0.b32.start [1/16] %v24, 128
    %29 = vxpose.xlu0.b32.cont [2/16] %v25, 128
    %30 = vxpose.xlu0.b32.cont [3/16] 0.0, 128
    %31 = vxpose.xlu0.b32.cont [4/16] 0.0, 128
    %32 = vxpose.xlu0.b32.cont [5/16] 0.0, 128
    %33 = vxpose.xlu0.b32.cont [6/16] 0.0, 128
    %34 = vxpose.xlu0.b32.cont [7/16] 0.0, 128
    %35 = vxpose.xlu0.b32.cont [8/16] 0.0, 128
    %36 = vxpose.xlu0.b32.cont [9/16] 0.0, 128
    %37 = vxpose.xlu0.b32.cont [10/16] 0.0, 128
    %38 = vxpose.xlu0.b32.cont [11/16] 0.0, 128
    %39 = vxpose.xlu0.b32.cont [12/16] 0.0, 128
    %40 = vxpose.xlu0.b32.cont [13/16] 0.0, 128
    %41 = vxpose.xlu0.b32.cont [14/16] 0.0, 128
    %42 = vxpose.xlu0.b32.cont [15/16] 0.0, 128
    %43 = vxpose.xlu0.b32.end [16/16] 0.0, 128
    %v44 = vpop.trf.xlu0
    %v45 = vpop.trf.xlu0
    %v46 = vpop.trf.xlu0
    %v47 = vpop.trf.xlu0
    %v48 = vpop.trf.xlu0
    %v49 = vpop.trf.xlu0
    %v50 = vpop.trf.xlu0
    %v51 = vpop.trf.xlu0
    %v52 = vpop.trf.xlu0
    %v53 = vpop.trf.xlu0
    %v54 = vpop.trf.xlu0
    %v55 = vpop.trf.xlu0
    %v56 = vpop.trf.xlu0
    %v57 = vpop.trf.xlu0
    %v58 = vpop.trf.xlu0
    %v59 = vpop.trf.xlu0
    %60 = vxpose.xlu0.b32.start [1/16] %v26, 128
    %61 = vxpose.xlu0.b32.cont [2/16] %v27, 128
    %62 = vxpose.xlu0.b32.cont [3/16] 0.0, 128
    %63 = vxpose.xlu0.b32.cont [4/16] 0.0, 128
    %64 = vxpose.xlu0.b32.cont [5/16] 0.0, 128
    %65 = vxpose.xlu0.b32.cont [6/16] 0.0, 128
    %66 = vxpose.xlu0.b32.cont [7/16] 0.0, 128
    %67 = vxpose.xlu0.b32.cont [8/16] 0.0, 128
    %68 = vxpose.xlu0.b32.cont [9/16] 0.0, 128
    %69 = vxpose.xlu0.b32.cont [10/16] 0.0, 128
    %70 = vxpose.xlu0.b32.cont [11/16] 0.0, 128
    %71 = vxpose.xlu0.b32.cont [12/16] 0.0, 128
    %72 = vxpose.xlu0.b32.cont [13/16] 0.0, 128
    %73 = vxpose.xlu0.b32.cont [14/16] 0.0, 128
    %74 = vxpose.xlu0.b32.cont [15/16] 0.0, 128
    %75 = vxpose.xlu0.b32.end [16/16] 0.0, 128
    %v76 = vpop.trf.xlu0
    %v77 = vpop.trf.xlu0
    %v78 = vpop.trf.xlu0
    %v79 = vpop.trf.xlu0
    %v80 = vpop.trf.xlu0
    %v81 = vpop.trf.xlu0
    %v82 = vpop.trf.xlu0
    %v83 = vpop.trf.xlu0
    %v84 = vpop.trf.xlu0
    %v85 = vpop.trf.xlu0
    %v86 = vpop.trf.xlu0
    %v87 = vpop.trf.xlu0
    %v88 = vpop.trf.xlu0
    %v89 = vpop.trf.xlu0
    %v90 = vpop.trf.xlu0
    %v91 = vpop.trf.xlu0
    %vm92 = vcmask 130048
    %93 = vst.msk [vmem:[%s1] sm:$0xff] %vm92, %v44
    %94 = vst.msk [vmem:[%s1 + $0x8] sm:$0xff] %vm92, %v45
    %95 = vst.msk [vmem:[%s1 + $0x10] sm:$0xff] %vm92, %v46
    %96 = vst.msk [vmem:[%s1 + $0x18] sm:$0xff] %vm92, %v47
    %97 = vst.msk [vmem:[%s1 + $0x20] sm:$0xff] %vm92, %v76
    %98 = vst.msk [vmem:[%s1 + $0x28] sm:$0xff] %vm92, %v77
    %99 = vst.msk [vmem:[%s1 + $0x30] sm:$0xff] %vm92, %v78
    %100 = vst.msk [vmem:[%s1 + $0x38] sm:$0xff] %vm92, %v79
    // Predicated region
    $region10: #{tpu_custom_call.1} parent=1 // pred_check
      _
    $region11: #{tpu_custom_call.1} parent=1 // pred_check_branch
      %102 = sbr.rel (0) target = $region13
    $region12: #{tpu_custom_call.1} parent=1 // pred_region
      _
    $region13: #{tpu_custom_call.1} parent=1 // pred_fallthru
      _
    // Predicated region
    $region14: #{tpu_custom_call.1} parent=1 // pred_check
      _
    $region15: #{tpu_custom_call.1} parent=1 // pred_check_branch
      %104 = sbr.rel (0) target = $region17
    $region16: #{tpu_custom_call.1} parent=1 // pred_region
      _
    $region17: #{tpu_custom_call.1} parent=1 // pred_fallthru
      _
    %105 = vsyncpa [#allocation3], 1

// kernel: tpu_custom_call.1
$region0: #{tpu_custom_call.1}
  #allocation0 [shape = 'u32[]', space=smem, size = 0x4, offset = 0x4, fixed_abs, tag = 'smem constant byte address 0x4 - core index']
  #allocation1 [shape = 'u32[72,128]{1,0:T(1,128)}', space=vmem, size = 0x9000, scoped, tag = 'internal scratch']
  %s0 = inlined_call_operand.hbm [shape: f32[2,16,32], index: 0, kind: input, shape index: {}]
  %s1 = inlined_call_operand.vmem [shape: f32[2,32,16], index: 1, kind: output, shape index: {}]
  %s2 = sld [smem:[#allocation0]]
  $region18: #{tpu_custom_call.1} parent=0
    _
  %s4 = ssub.s32 1, %s2
  %s5 = scalar_select 0, %s4, %s2
  $region1: #{tpu_custom_call.1} parent=0
    #allocation2 [shape = 'u8[16384]{0}', space=vmem, size = 0x4000, scoped, tag = 'input window, operand 0, single buffered']
    #allocation3 [shape = 's32[1]{0}', space=sflag, size = 0x4, scoped, tag = 'scoped memory for tpu_custom_call.1']
    %6 = vsyncpa [#allocation3], 0
    // Predicated region
    $region2: #{tpu_custom_call.1} parent=1 // pred_check
      _
    $region3: #{tpu_custom_call.1} parent=1 // pred_check_branch
      %8 = sbr.rel (0) target = $region5
    $region4: #{tpu_custom_call.1} parent=1 // pred_region
      %10 = vsyncadd [#allocation3], 0
      %s11 = sshll.u32 %s0, 4
      %s12 = int_to_ptr.hbm [resolvable:$true] %s11
      %s13 = sshll.u32 [#allocation2], 4
      %s14 = int_to_ptr.vmem [resolvable:$true] %s13
      %19 = dma.hbm_to_vmem [thread:$0]  %s12, 512, %s14, [#allocation3], 128, 128, 8
    $region5: #{tpu_custom_call.1} parent=1 // pred_fallthru
      _
    // Predicated region
    $region6: #{tpu_custom_call.1} parent=1 // pred_check
      _
    $region7: #{tpu_custom_call.1} parent=1 // pred_check_branch
      %21 = sbr.rel (0) target = $region9
    $region8: #{tpu_custom_call.1} parent=1 // pred_region
      %23 = dma.done [#allocation3], 512
    $region9: #{tpu_custom_call.1} parent=1 // pred_fallthru
      _
    %v24 = vld [vmem:[#allocation2] sm:$0xff]
    %v25 = vld [vmem:[#allocation2 + $0x8] sm:$0xff]
    %v26 = vld [vmem:[#allocation2 + $0x10] sm:$0xff]
    %v27 = vld [vmem:[#allocation2 + $0x18] sm:$0xff]
    %28 = vxpose.xlu0.b32.start [1/16] %v24, 128
    %29 = vxpose.xlu0.b32.cont [2/16] %v25, 128
    %30 = vxpose.xlu0.b32.cont [3/16] 0.0, 128
    %31 = vxpose.xlu0.b32.cont [4/16] 0.0, 128
    %32 = vxpose.xlu0.b32.cont [5/16] 0.0, 128
    %33 = vxpose.xlu0.b32.cont [6/16] 0.0, 128
    %34 = vxpose.xlu0.b32.cont [7/16] 0.0, 128
    %35 = vxpose.xlu0.b32.cont [8/16] 0.0, 128
    %36 = vxpose.xlu0.b32.cont [9/16] 0.0, 128
    %37 = vxpose.xlu0.b32.cont [10/16] 0.0, 128
    %38 = vxpose.xlu0.b32.cont [11/16] 0.0, 128
    %39 = vxpose.xlu0.b32.cont [12/16] 0.0, 128
    %40 = vxpose.xlu0.b32.cont [13/16] 0.0, 128
    %41 = vxpose.xlu0.b32.cont [14/16] 0.0, 128
    %42 = vxpose.xlu0.b32.cont [15/16] 0.0, 128
    %43 = vxpose.xlu0.b32.end [16/16] 0.0, 128
    %v44 = vpop.trf.xlu0
    %v45 = vpop.trf.xlu0
    %v46 = vpop.trf.xlu0
    %v47 = vpop.trf.xlu0
    %v48 = vpop.trf.xlu0
    %v49 = vpop.trf.xlu0
    %v50 = vpop.trf.xlu0
    %v51 = vpop.trf.xlu0
    %v52 = vpop.trf.xlu0
    %v53 = vpop.trf.xlu0
    %v54 = vpop.trf.xlu0
    %v55 = vpop.trf.xlu0
    %v56 = vpop.trf.xlu0
    %v57 = vpop.trf.xlu0
    %v58 = vpop.trf.xlu0
    %v59 = vpop.trf.xlu0
    %60 = vxpose.xlu0.b32.start [1/16] %v26, 128
    %61 = vxpose.xlu0.b32.cont [2/16] %v27, 128
    %62 = vxpose.xlu0.b32.cont [3/16] 0.0, 128
    %63 = vxpose.xlu0.b32.cont [4/16] 0.0, 128
    %64 = vxpose.xlu0.b32.cont [5/16] 0.0, 128
    %65 = vxpose.xlu0.b32.cont [6/16] 0.0, 128
    %66 = vxpose.xlu0.b32.cont [7/16] 0.0, 128
    %67 = vxpose.xlu0.b32.cont [8/16] 0.0, 128
    %68 = vxpose.xlu0.b32.cont [9/16] 0.0, 128
    %69 = vxpose.xlu0.b32.cont [10/16] 0.0, 128
    %70 = vxpose.xlu0.b32.cont [11/16] 0.0, 128
    %71 = vxpose.xlu0.b32.cont [12/16] 0.0, 128
    %72 = vxpose.xlu0.b32.cont [13/16] 0.0, 128
    %73 = vxpose.xlu0.b32.cont [14/16] 0.0, 128
    %74 = vxpose.xlu0.b32.cont [15/16] 0.0, 128
    %75 = vxpose.xlu0.b32.end [16/16] 0.0, 128
    %v76 = vpop.trf.xlu0
    %v77 = vpop.trf.xlu0
    %v78 = vpop.trf.xlu0
    %v79 = vpop.trf.xlu0
    %v80 = vpop.trf.xlu0
    %v81 = vpop.trf.xlu0
    %v82 = vpop.trf.xlu0
    %v83 = vpop.trf.xlu0
    %v84 = vpop.trf.xlu0
    %v85 = vpop.trf.xlu0
    %v86 = vpop.trf.xlu0
    %v87 = vpop.trf.xlu0
    %v88 = vpop.trf.xlu0
    %v89 = vpop.trf.xlu0
    %v90 = vpop.trf.xlu0
    %v91 = vpop.trf.xlu0
    %vm92 = vcmask 130048
    %93 = vst.msk [vmem:[%s1] sm:$0xff] %vm92, %v44
    %94 = vst.msk [vmem:[%s1 + $0x8] sm:$0xff] %vm92, %v45
    %95 = vst.msk [vmem:[%s1 + $0x10] sm:$0xff] %vm92, %v46
    %96 = vst.msk [vmem:[%s1 + $0x18] sm:$0xff] %vm92, %v47
    %97 = vst.msk [vmem:[%s1 + $0x20] sm:$0xff] %vm92, %v76
    %98 = vst.msk [vmem:[%s1 + $0x28] sm:$0xff] %vm92, %v77
    %99 = vst.msk [vmem:[%s1 + $0x30] sm:$0xff] %vm92, %v78
    %100 = vst.msk [vmem:[%s1 + $0x38] sm:$0xff] %vm92, %v79
    // Predicated region
    $region10: #{tpu_custom_call.1} parent=1 // pred_check
      _
    $region11: #{tpu_custom_call.1} parent=1 // pred_check_branch
      %102 = sbr.rel (0) target = $region13
    $region12: #{tpu_custom_call.1} parent=1 // pred_region
      _
    $region13: #{tpu_custom_call.1} parent=1 // pred_fallthru
      _
    // Predicated region
    $region14: #{tpu_custom_call.1} parent=1 // pred_check
      _
    $region15: #{tpu_custom_call.1} parent=1 // pred_check_branch
      %104 = sbr.rel (0) target = $region17
    $region16: #{tpu_custom_call.1} parent=1 // pred_region
      _
    $region17: #{tpu_custom_call.1} parent=1 // pred_fallthru
      _
    %105 = vsyncpa [#allocation3], 1

// kernel: tpu_custom_call.1
$region0: #{tpu_custom_call.1}
  #allocation0 [shape = 'u32[]', space=smem, size = 0x4, offset = 0x4, fixed_abs, tag = 'smem constant byte address 0x4 - core index']
  #allocation1 [shape = 'u32[72,128]{1,0:T(1,128)}', space=vmem, size = 0x9000, scoped, tag = 'internal scratch']
  %s0 = inlined_call_operand.hbm [shape: f32[2,16,32], index: 0, kind: input, shape index: {}]
  %s1 = inlined_call_operand.vmem [shape: f32[2,32,16], index: 1, kind: output, shape index: {}]
  %s2 = sld [smem:[#allocation0]]
  $region25: #{tpu_custom_call.1} parent=0
    _
  %s4 = ssub.s32 1, %s2
  %s5 = scalar_select 0, %s4, %s2
  $region1: #{tpu_custom_call.1} parent=0
    #allocation2 [shape = 'u8[16384]{0}', space=vmem, size = 0x4000, scoped, tag = 'input window, operand 0, single buffered']
    #allocation3 [shape = 's32[1]{0}', space=sflag, size = 0x4, scoped, tag = 'scoped memory for tpu_custom_call.1']
    %6 = vsyncpa [#allocation3], 0
    // Predicated region
    $region2: #{tpu_custom_call.1} parent=1 // pred_check
      _
    $region3: #{tpu_custom_call.1} parent=1 // pred_check_branch
      %8 = sbr.rel (0) target = $region5
    $region4: #{tpu_custom_call.1} parent=1 // pred_region
      %10 = vsyncadd [#allocation3], 0
      %s11 = sshll.u32 %s0, 4
      %s12 = int_to_ptr.hbm [resolvable:$true] %s11
      %s13 = sshll.u32 [#allocation2], 4
      %s14 = int_to_ptr.vmem [resolvable:$true] %s13
      %19 = dma.hbm_to_vmem [thread:$0]  %s12, 512, %s14, [#allocation3], 128, 128, 8
    $region5: #{tpu_custom_call.1} parent=1 // pred_fallthru
      _
    // Predicated region
    $region6: #{tpu_custom_call.1} parent=1 // pred_check
      _
    $region7: #{tpu_custom_call.1} parent=1 // pred_check_branch
      %21 = sbr.rel (0) target = $region9
    $region8: #{tpu_custom_call.1} parent=1 // pred_region
      %23 = dma.done [#allocation3], 512
    $region9: #{tpu_custom_call.1} parent=1 // pred_fallthru
      _
    loop: start=0, step=1, limit=2
    $region10: #{tpu_custom_call.1} parent=1 // loop_pre_header
      _
    $region11: #{tpu_custom_call.1} parent=1 // loop_header
      %s25 = sphi 0, %s29
      %p26 = scmp.ge.s32.totalorder %s25, 2
    $region12: #{tpu_custom_call.1} parent=1 // loop_header_branch
      %28 = sbr.rel (%p26) target = $region16
    $region13: #{tpu_custom_call.1} parent=1 // loop_body
      %s30 = smul.u32 %s25, 16
      %s31 = scalar_lea.vmem [#allocation2], %s30
      %v32 = vld [vmem:[%s31] sm:$0xff]
      %v33 = vld [vmem:[%s31 + $0x8] sm:$0xff]
      %34 = vxpose.xlu0.b32.start [1/16] %v32, 128
      %35 = vxpose.xlu0.b32.cont [2/16] %v33, 128
      %36 = vxpose.xlu0.b32.cont [3/16] 0.0, 128
      %37 = vxpose.xlu0.b32.cont [4/16] 0.0, 128
      %38 = vxpose.xlu0.b32.cont [5/16] 0.0, 128
      %39 = vxpose.xlu0.b32.cont [6/16] 0.0, 128
      %40 = vxpose.xlu0.b32.cont [7/16] 0.0, 128
      %41 = vxpose.xlu0.b32.cont [8/16] 0.0, 128
      %42 = vxpose.xlu0.b32.cont [9/16] 0.0, 128
      %43 = vxpose.xlu0.b32.cont [10/16] 0.0, 128
      %44 = vxpose.xlu0.b32.cont [11/16] 0.0, 128
      %45 = vxpose.xlu0.b32.cont [12/16] 0.0, 128
      %46 = vxpose.xlu0.b32.cont [13/16] 0.0, 128
      %47 = vxpose.xlu0.b32.cont [14/16] 0.0, 128
      %48 = vxpose.xlu0.b32.cont [15/16] 0.0, 128
      %49 = vxpose.xlu0.b32.end [16/16] 0.0, 128
      %v50 = vpop.trf.xlu0
      %v51 = vpop.trf.xlu0
      %v52 = vpop.trf.xlu0
      %v53 = vpop.trf.xlu0
      %v54 = vpop.trf.xlu0
      %v55 = vpop.trf.xlu0
      %v56 = vpop.trf.xlu0
      %v57 = vpop.trf.xlu0
      %v58 = vpop.trf.xlu0
      %v59 = vpop.trf.xlu0
      %v60 = vpop.trf.xlu0
      %v61 = vpop.trf.xlu0
      %v62 = vpop.trf.xlu0
      %v63 = vpop.trf.xlu0
      %v64 = vpop.trf.xlu0
      %v65 = vpop.trf.xlu0
      %s66 = smul.u32 %s25, 32
      %s67 = scalar_lea.vmem %s1, %s66
      %vm68 = vcmask 130048
      %69 = vst.msk [vmem:[%s67] sm:$0xff] %vm68, %v50
      %70 = vst.msk [vmem:[%s67 + $0x8] sm:$0xff] %vm68, %v51
      %71 = vst.msk [vmem:[%s67 + $0x10] sm:$0xff] %vm68, %v52
      %72 = vst.msk [vmem:[%s67 + $0x18] sm:$0xff] %vm68, %v53
    $region14: #{tpu_custom_call.1} parent=1 // loop_footer
      %s29 = sadd.s32 1, %s25
    $region15: #{tpu_custom_call.1} parent=1 // loop_footer_branch
      %24 = sbr.rel target = $region11
    $region16: #{tpu_custom_call.1} parent=1 // loop_exit
      _
    // Predicated region
    $region17: #{tpu_custom_call.1} parent=1 // pred_check
      _
    $region18: #{tpu_custom_call.1} parent=1 // pred_check_branch
      %74 = sbr.rel (0) target = $region20
    $region19: #{tpu_custom_call.1} parent=1 // pred_region
      _
    $region20: #{tpu_custom_call.1} parent=1 // pred_fallthru
      _
    // Predicated region
    $region21: #{tpu_custom_call.1} parent=1 // pred_check
      _
    $region22: #{tpu_custom_call.1} parent=1 // pred_check_branch
      %76 = sbr.rel (0) target = $region24
    $region23: #{tpu_custom_call.1} parent=1 // pred_region
      _
    $region24: #{tpu_custom_call.1} parent=1 // pred_fallthru
      _
    %77 = vsyncpa [#allocation3], 1

</llo_original>
